<compile_context>
chip_gen: v6e
topology: v6e:2x2x1
jax: 0.10.0
libtpu: 0.0.40
codegen_flags: <defaults>
</compile_context>

<pallas_src>
import functools

import jax
import jax.numpy as jnp
from jax.experimental import pallas as pl
from jax.experimental.pallas import tpu as pltpu


def _round_up(n, m):
    return ((n + m - 1) // m) * m


def _vmem_limit(need_bytes):
    # Explicit scoped-VMEM request: >= 32 MiB (above v5e's 16 MiB default),
    # <= 64 MiB (v7x physical), with 25% headroom over the computed need.
    return int(min(max(need_bytes * 5 // 4, 32 * 1024 * 1024), 64 * 1024 * 1024))


# ----------------------------------------------------------------------------
# Path A: whole weight stack resident in VMEM, single grid step (demo regime).
# ----------------------------------------------------------------------------
def _resident_kernel(x_ref, w_ref, g_ref, o_ref):
    """x_ref (B, Dp) f32, w_ref (L, Dp, Dp) bf16 (pre-transposed to Din x Dout),
    g_ref (L, B, 1) f32 (hoisted sigmoid gates), o_ref (B, Dp) f32."""
    n_layers = w_ref.shape[0]
    # bf16 activation carry between layers (MXU input dtype); gate/ReLU in f32.
    act = x_ref[...].astype(jnp.bfloat16)
    for l in range(n_layers - 1):            # static L -> fully unrolled
        y = jnp.dot(act, w_ref[l], preferred_element_type=jnp.float32)
        act = jnp.maximum(y * g_ref[l], 0.0).astype(jnp.bfloat16)
    y = jnp.dot(act, w_ref[n_layers - 1], preferred_element_type=jnp.float32)
    o_ref[...] = jnp.maximum(y * g_ref[n_layers - 1], 0.0)   # final layer kept f32


@jax.jit
def _fused_forward_resident(x_pad, w_stack, g_stack):
    B, d_pad = x_pad.shape
    L = w_stack.shape[0]
    need = (B * d_pad * 4                 # x
            + L * d_pad * d_pad * 2       # weight stack (bf16)
            + L * B * 128 * 4             # gates (lane-padded)
            + B * d_pad * 4               # out
            + 4 * B * d_pad * 4)          # working temps (f32 y, bf16 act, ...)
    return pl.pallas_call(
        _resident_kernel,
        out_shape=jax.ShapeDtypeStruct((B, d_pad), jnp.float32),
        compiler_params=pltpu.CompilerParams(vmem_limit_bytes=_vmem_limit(need)),
    )(x_pad, w_stack, g_stack)


# ----------------------------------------------------------------------------
# Path B: one layer per grid step, weights streamed from HBM (large regime).
# ----------------------------------------------------------------------------
def _stream_kernel(x_ref, g_ref, w_ref, o_ref, act_ref):
    """grid=(L,). x_ref (B, Dp) f32 [constant block], g_ref (L, B, 1) f32
    [constant block], w_ref (Dp, Dp) bf16 [this layer, double-buffered],
    o_ref (B, Dp) f32 [constant block, HBM writeback once at grid end],
    act_ref (B, Dp) bf16 VMEM scratch carried across grid steps."""
    layer = pl.program_id(0)

    @pl.when(layer == 0)
    def _():
        act_ref[...] = x_ref[...].astype(jnp.bfloat16)

    # MXU matmul: bf16 inputs, f32 accumulation; weights are already (Din, Dout).
    y = jnp.dot(act_ref[...], w_ref[...], preferred_element_type=jnp.float32)
    a = jnp.maximum(y * g_ref[layer], 0.0)        # f32 gate (row-wise) + ReLU
    act_ref[...] = a.astype(jnp.bfloat16)         # bf16 carry for the next layer

    @pl.when(layer == pl.num_programs(0) - 1)
    def _():
        o_ref[...] = a                            # full-precision final layer


@jax.jit
def _fused_forward_stream(x_pad, w_stack, g_stack):
    B, d_pad = x_pad.shape
    L = w_stack.shape[0]
    need = (2 * B * d_pad * 4                # x (constant block, 2 buffers)
            + 2 * L * B * 128 * 4            # gates (lane-padded, 2 buffers)
            + 2 * d_pad * d_pad * 2          # weight slab double buffer (bf16)
            + 2 * B * d_pad * 4              # out (2 buffers)
            + B * d_pad * 2                  # bf16 act scratch
            + 4 * B * d_pad * 4)             # working temps
    return pl.pallas_call(
        _stream_kernel,
        out_shape=jax.ShapeDtypeStruct((B, d_pad), jnp.float32),
        grid=(L,),
        in_specs=[
            # network input: constant index -> fetched once, VMEM-resident.
            pl.BlockSpec((B, d_pad), lambda l: (0, 0)),
            # ALL gates in one tiny constant-index block, indexed in-kernel.
            pl.BlockSpec((L, B, 1), lambda l: (0, 0, 0)),
            # weights: one (Dp, Dp) layer slab per grid step, pipelined.
            pl.BlockSpec((None, d_pad, d_pad), lambda l: (l, 0, 0)),
        ],
        # constant-index output block: stays in VMEM, written back to HBM once.
        out_specs=pl.BlockSpec((B, d_pad), lambda l: (0, 0)),
        scratch_shapes=[pltpu.VMEM((B, d_pad), jnp.bfloat16)],
        compiler_params=pltpu.CompilerParams(
            # the activation carried through act_ref makes the layer axis sequential.
            dimension_semantics=("arbitrary",),
            vmem_limit_bytes=_vmem_limit(need),
        ),
    )(x_pad, g_stack, w_stack)


# ----------------------------------------------------------------------------
# Module wrapper.
# ----------------------------------------------------------------------------
class DynamicNeuralArch:
    """JAX mirror of the PyTorch module: a growable stack of NeurogeneticLayers,
    executed as ONE fused Pallas kernel per forward call."""

    # Use the fully VMEM-resident single-step path while it fits comfortably on
    # every TPU generation; otherwise stream one layer per grid step.
    _RESIDENT_BYTES_LIMIT = 20 * 1024 * 1024

    def __init__(self, initial_dim=768):
        self.layers = []          # [(weights (Dout, Din) f32, apoptosis (Dout,) f32)]
        self.current_dim = initial_dim
        self._key = jax.random.PRNGKey(42)
        self._packed = None       # cached (d_pad, w_stack bf16, g_stack f32)

    def add_layer(self, new_dim):
        # Mirrors NeurogeneticLayer.__init__: weights ~ randn, apoptosis = zeros.
        self._key, sub = jax.random.split(self._key)
        w = jax.random.normal(sub, (new_dim, self.current_dim), jnp.float32)
        a = jnp.zeros((new_dim,), jnp.float32)
        self.layers.append((w, a))
        self.current_dim = new_dim
        self._packed = None       # invalidate the packed-weight cache

    def _pack(self):
        """Build (once per architecture change) the padded, pre-transposed bf16
        weight stack and the hoisted sigmoid gates."""
        if self._packed is not None:
            return self._packed
        dims = [self.layers[0][0].shape[1]] + [w.shape[0] for w, _ in self.layers]
        d_pad = _round_up(max(dims), 128)       # lane-dense feature dim
        douts = {w.shape[0] for w, _ in self.layers}
        assert len(douts) == 1, "all output dims must match (torch broadcast needs Dout == batch)"
        w_list, g_list = [], []
        for w, a in self.layers:
            dout, din = w.shape
            # Pre-transpose once to (Din, Dout), bf16 for the MXU; zero-pad is
            # semantically inert (padded columns stay zero through gate/ReLU
            # and feed zero weight rows of the next layer).
            wt = jnp.pad(w.T.astype(jnp.bfloat16),
                         ((0, d_pad - din), (0, d_pad - dout)))
            w_list.append(wt)
            g_list.append(jax.nn.sigmoid(a.astype(jnp.float32)).reshape(dout, 1))
        self._packed = (d_pad, jnp.stack(w_list), jnp.stack(g_list))
        return self._packed

    def __call__(self, x):
        if not self.layers:
            return x
        B = x.shape[0]
        for w, _ in self.layers:
            # torch broadcasts a (Dout, 1) gate against the (B, Dout) matmul
            # result: only legal (and row-scaling) when Dout == B.
            assert w.shape[0] == B, "PyTorch broadcast requires output_dim == batch size"
        d_pad, w_stack, g_stack = self._pack()
        L = w_stack.shape[0]

        d_in = self.layers[0][0].shape[1]
        if d_in == d_pad:
            x_pad = x.astype(jnp.float32)
        else:
            x_pad = jnp.zeros((B, d_pad), jnp.float32).at[:, :d_in].set(
                x.astype(jnp.float32))

        resident_need = (L * d_pad * d_pad * 2 + 2 * B * d_pad * 4
                         + L * B * 128 * 4 + 4 * B * d_pad * 4)
        if resident_need <= self._RESIDENT_BYTES_LIMIT:
            out = _fused_forward_resident(x_pad, w_stack, g_stack)
        else:
            out = _fused_forward_stream(x_pad, w_stack, g_stack)
        return out[:, : self.layers[-1][0].shape[0]]


if __name__ == "__main__":
    # Small but lane-dense shapes. B must equal every layer's output_dim for
    # the original (Dout, 1) broadcast to be legal.
    B = 128
    D = 128

    model = DynamicNeuralArch(initial_dim=D)
    model.add_layer(D)
    model.add_layer(D)
    model.add_layer(D)

    x = jax.random.normal(jax.random.PRNGKey(0), (B, D), jnp.float32)

    # Path A (resident, single grid step) — the regime the demo is in.
    out = jax.block_until_ready(model(x))
    assert out.shape == (B, D), out.shape

    # Pure-JAX reference of the exact PyTorch semantics, using the same
    # bf16-matmul / f32-accumulate numerics as the kernel.
    ref = x
    for w, a in model.layers:
        y = jnp.dot(ref.astype(jnp.bfloat16), w.T.astype(jnp.bfloat16),
                    preferred_element_type=jnp.float32)
        ref = jnp.maximum(y * jax.nn.sigmoid(a)[:, None], 0.0)

    scale = float(jnp.maximum(jnp.max(jnp.abs(ref)), 1.0))
    err = float(jnp.max(jnp.abs(out - ref)))
    assert err <= 2e-2 * scale + 1e-3, (err, scale)

    # Path B (streaming, one layer per grid step) — exercised explicitly so the
    # large-model code path is also compiled and verified.
    d_pad, w_stack, g_stack = model._pack()
    out2 = jax.block_until_ready(_fused_forward_stream(x, w_stack, g_stack))
    err2 = float(jnp.max(jnp.abs(out2[:, :D] - ref)))
    assert err2 <= 2e-2 * scale + 1e-3, (err2, scale)

    print("KERNEL_OK")
</pallas_src>

<mosaic_0001>
module attributes {stable_mosaic.version = 11 : i64} {
  func.func @_resident_kernel(%arg0: memref<128x128xf32, #tpu.memory_space<vmem>>, %arg1: memref<3x128x128xbf16, #tpu.memory_space<vmem>>, %arg2: memref<3x128x1xf32, #tpu.memory_space<vmem>>, %arg3: memref<128x128xf32, #tpu.memory_space<vmem>>) attributes {dimension_semantics = [], scalar_prefetch = 0 : i64, scratch_operands = 0 : i64, tpu.core_type = #tpu.core_type<tc>} {
    %c0 = arith.constant 0 : index
    %c0_0 = arith.constant 0 : index
    %0 = vector.load %arg0[%c0, %c0_0] : memref<128x128xf32, #tpu.memory_space<vmem>>, vector<128x128xf32>
    %1 = arith.truncf %0 : vector<128x128xf32> to vector<128x128xbf16>
    %c0_1 = arith.constant 0 : index
    %c0_2 = arith.constant 0 : index
    %c0_3 = arith.constant 0 : index
    %2 = vector.load %arg1[%c0_1, %c0_2, %c0_3] : memref<3x128x128xbf16, #tpu.memory_space<vmem>>, vector<1x128x128xbf16>
    %3 = vector.shape_cast %2 : vector<1x128x128xbf16> to vector<128x128xbf16>
    %cst = arith.constant dense<0.000000e+00> : vector<128x128xf32>
    %4 = tpu.matmul %1, %3, %cst {dimension_numbers = #tpu.dot_dimension_numbers<[1], [0], [0], [1], [0, 0, 1, 1], [], []>} : vector<128x128xbf16>, vector<128x128xbf16>, vector<128x128xf32> -> vector<128x128xf32>
    %c0_4 = arith.constant 0 : index
    %c0_5 = arith.constant 0 : index
    %c0_6 = arith.constant 0 : index
    %5 = vector.load %arg2[%c0_4, %c0_5, %c0_6] : memref<3x128x1xf32, #tpu.memory_space<vmem>>, vector<1x128x1xf32>
    %6 = vector.shape_cast %5 : vector<1x128x1xf32> to vector<128x1xf32>
    %7 = vector.broadcast %6 : vector<128x1xf32> to vector<128x128xf32>
    %8 = arith.mulf %4, %7 : vector<128x128xf32>
    %cst_7 = arith.constant 0.000000e+00 : f32
    %9 = vector.broadcast %cst_7 : f32 to vector<128x128xf32>
    %10 = arith.maximumf %8, %9 : vector<128x128xf32>
    %11 = arith.truncf %10 : vector<128x128xf32> to vector<128x128xbf16>
    %c1 = arith.constant 1 : index
    %c0_8 = arith.constant 0 : index
    %c0_9 = arith.constant 0 : index
    %12 = vector.load %arg1[%c1, %c0_8, %c0_9] : memref<3x128x128xbf16, #tpu.memory_space<vmem>>, vector<1x128x128xbf16>
    %13 = vector.shape_cast %12 : vector<1x128x128xbf16> to vector<128x128xbf16>
    %cst_10 = arith.constant dense<0.000000e+00> : vector<128x128xf32>
    %14 = tpu.matmul %11, %13, %cst_10 {dimension_numbers = #tpu.dot_dimension_numbers<[1], [0], [0], [1], [0, 0, 1, 1], [], []>} : vector<128x128xbf16>, vector<128x128xbf16>, vector<128x128xf32> -> vector<128x128xf32>
    %c1_11 = arith.constant 1 : index
    %c0_12 = arith.constant 0 : index
    %c0_13 = arith.constant 0 : index
    %15 = vector.load %arg2[%c1_11, %c0_12, %c0_13] : memref<3x128x1xf32, #tpu.memory_space<vmem>>, vector<1x128x1xf32>
    %16 = vector.shape_cast %15 : vector<1x128x1xf32> to vector<128x1xf32>
    %17 = vector.broadcast %16 : vector<128x1xf32> to vector<128x128xf32>
    %18 = arith.mulf %14, %17 : vector<128x128xf32>
    %cst_14 = arith.constant 0.000000e+00 : f32
    %19 = vector.broadcast %cst_14 : f32 to vector<128x128xf32>
    %20 = arith.maximumf %18, %19 : vector<128x128xf32>
    %21 = arith.truncf %20 : vector<128x128xf32> to vector<128x128xbf16>
    %c2 = arith.constant 2 : index
    %c0_15 = arith.constant 0 : index
    %c0_16 = arith.constant 0 : index
    %22 = vector.load %arg1[%c2, %c0_15, %c0_16] : memref<3x128x128xbf16, #tpu.memory_space<vmem>>, vector<1x128x128xbf16>
    %23 = vector.shape_cast %22 : vector<1x128x128xbf16> to vector<128x128xbf16>
    %cst_17 = arith.constant dense<0.000000e+00> : vector<128x128xf32>
    %24 = tpu.matmul %21, %23, %cst_17 {dimension_numbers = #tpu.dot_dimension_numbers<[1], [0], [0], [1], [0, 0, 1, 1], [], []>} : vector<128x128xbf16>, vector<128x128xbf16>, vector<128x128xf32> -> vector<128x128xf32>
    %c2_18 = arith.constant 2 : index
    %c0_19 = arith.constant 0 : index
    %c0_20 = arith.constant 0 : index
    %25 = vector.load %arg2[%c2_18, %c0_19, %c0_20] : memref<3x128x1xf32, #tpu.memory_space<vmem>>, vector<1x128x1xf32>
    %26 = vector.shape_cast %25 : vector<1x128x1xf32> to vector<128x1xf32>
    %27 = vector.broadcast %26 : vector<128x1xf32> to vector<128x128xf32>
    %28 = arith.mulf %24, %27 : vector<128x128xf32>
    %cst_21 = arith.constant 0.000000e+00 : f32
    %29 = vector.broadcast %cst_21 : f32 to vector<128x128xf32>
    %30 = arith.maximumf %28, %29 : vector<128x128xf32>
    %c0_22 = arith.constant 0 : index
    %c0_23 = arith.constant 0 : index
    %31 = vector.load %arg3[%c0_22, %c0_23] : memref<128x128xf32, #tpu.memory_space<vmem>>, vector<128x128xf32>
    tpu.vector_store %arg3[%c0_22, %c0_23], %30 {strides = array<i32>} : memref<128x128xf32, #tpu.memory_space<vmem>>, vector<128x128xf32>,
    return
  }
}

</mosaic_0001>

<llo_original>
// kernel: _fused_forward_resident.1
$region0: #{_fused_forward_resident.1}
  #allocation0 [shape = 'u32[]', space=smem, size = 0x4, offset = 0x4, fixed_abs, tag = 'smem constant byte address 0x4 - core index']
  #allocation1 [shape = 'u32[144,128]{1,0:T(1,128)}', space=vmem, size = 0x12000, scoped, tag = 'internal scratch']
  %s0 = inlined_call_operand.vmem [shape: f32[128,128], index: 0, kind: input, shape index: {}]
  %s1 = inlined_call_operand.vmem [shape: bf16[3,128,128], index: 1, kind: input, shape index: {}]
  %s2 = inlined_call_operand.vmem [shape: f32[3,128,1], index: 2, kind: input, shape index: {}]
  %s3 = inlined_call_operand.hbm [shape: f32[128,128], index: 3, kind: output, shape index: {}]
  %s4 = sld [smem:[#allocation0]]
  $region22: #{_fused_forward_resident.1} parent=0
    _
  %s6 = ssub.s32 1, %s4
  %s7 = scalar_select 0, %s6, %s4
  $region1: #{_fused_forward_resident.1} parent=0
    #allocation2 [shape = 'u8[65536]{0}', space=vmem, size = 0x10000, scoped, tag = 'output window, operand 0, single buffered']
    #allocation3 [shape = 's32[1]{0}', space=sflag, size = 0x4, scoped, tag = 'scoped memory for _fused_forward_resident.1']
    %8 = vsyncpa [#allocation3], 0
    // Predicated region
    $region2: #{_fused_forward_resident.1} parent=1 // pred_check
      _
    $region3: #{_fused_forward_resident.1} parent=1 // pred_check_branch
      %10 = sbr.rel (0) target = $region5
    $region4: #{_fused_forward_resident.1} parent=1 // pred_region
      _
    $region5: #{_fused_forward_resident.1} parent=1 // pred_fallthru
      _
    // Predicated region
    $region6: #{_fused_forward_resident.1} parent=1 // pred_check
      _
    $region7: #{_fused_forward_resident.1} parent=1 // pred_check_branch
      %12 = sbr.rel (0) target = $region9
    $region8: #{_fused_forward_resident.1} parent=1 // pred_region
      _
    $region9: #{_fused_forward_resident.1} parent=1 // pred_fallthru
      _
    // Predicated region
    $region10: #{_fused_forward_resident.1} parent=1 // pred_check
      _
    $region11: #{_fused_forward_resident.1} parent=1 // pred_check_branch
      %14 = sbr.rel (0) target = $region13
    $region12: #{_fused_forward_resident.1} parent=1 // pred_region
      _
    $region13: #{_fused_forward_resident.1} parent=1 // pred_fallthru
      _
    %v16 = vld [vmem:[%s0] sm:$0xff]
    %v17 = vld [vmem:[%s0 + $0x8] sm:$0xff]
    %v18 = vld [vmem:[%s0 + $0x10] sm:$0xff]
    %v19 = vld [vmem:[%s0 + $0x18] sm:$0xff]
    %v20 = vld [vmem:[%s0 + $0x20] sm:$0xff]
    %v21 = vld [vmem:[%s0 + $0x28] sm:$0xff]
    %v22 = vld [vmem:[%s0 + $0x30] sm:$0xff]
    %v23 = vld [vmem:[%s0 + $0x38] sm:$0xff]
    %v24 = vld [vmem:[%s0 + $0x40] sm:$0xff]
    %v25 = vld [vmem:[%s0 + $0x48] sm:$0xff]
    %v26 = vld [vmem:[%s0 + $0x50] sm:$0xff]
    %v27 = vld [vmem:[%s0 + $0x58] sm:$0xff]
    %v28 = vld [vmem:[%s0 + $0x60] sm:$0xff]
    %v29 = vld [vmem:[%s0 + $0x68] sm:$0xff]
    %v30 = vld [vmem:[%s0 + $0x70] sm:$0xff]
    %v31 = vld [vmem:[%s0 + $0x78] sm:$0xff]
    %v32 = vpack.c.bf16 %v17, %v16
    %v33 = vpack.c.bf16 %v19, %v18
    %v34 = vpack.c.bf16 %v21, %v20
    %v35 = vpack.c.bf16 %v23, %v22
    %v36 = vpack.c.bf16 %v25, %v24
    %v37 = vpack.c.bf16 %v27, %v26
    %v38 = vpack.c.bf16 %v29, %v28
    %v39 = vpack.c.bf16 %v31, %v30
    %v40 = vld [vmem:[%s1] sm:$0xf]
    %v41 = vld [vmem:[%s1 + $0x4] sm:$0xf]
    %v42 = vld [vmem:[%s1 + $0x8] sm:$0xf]
    %v43 = vld [vmem:[%s1 + $0xc] sm:$0xf]
    %v44 = vld [vmem:[%s1 + $0x10] sm:$0xf]
    %v45 = vld [vmem:[%s1 + $0x14] sm:$0xf]
    %v46 = vld [vmem:[%s1 + $0x18] sm:$0xf]
    %v47 = vld [vmem:[%s1 + $0x1c] sm:$0xf]
    %v48 = vld [vmem:[%s1 + $0x20] sm:$0xf]
    %v49 = vld [vmem:[%s1 + $0x24] sm:$0xf]
    %v50 = vld [vmem:[%s1 + $0x28] sm:$0xf]
    %v51 = vld [vmem:[%s1 + $0x2c] sm:$0xf]
    %v52 = vld [vmem:[%s1 + $0x30] sm:$0xf]
    %v53 = vld [vmem:[%s1 + $0x34] sm:$0xf]
    %v54 = vld [vmem:[%s1 + $0x38] sm:$0xf]
    %v55 = vld [vmem:[%s1 + $0x3c] sm:$0xf]
    %v72 = vunpack.c.l.b16 %v40
    %v73 = vunpack.c.l.b16 %v41
    %v74 = vunpack.c.l.b16 %v42
    %v75 = vunpack.c.l.b16 %v43
    %v76 = vunpack.c.l.b16 %v44
    %v77 = vunpack.c.l.b16 %v45
    %v78 = vunpack.c.l.b16 %v46
    %v79 = vunpack.c.l.b16 %v47
    %v80 = vunpack.c.l.b16 %v48
    %v81 = vunpack.c.l.b16 %v49
    %v82 = vunpack.c.l.b16 %v50
    %v83 = vunpack.c.l.b16 %v51
    %v84 = vunpack.c.l.b16 %v52
    %v85 = vunpack.c.l.b16 %v53
    %v86 = vunpack.c.l.b16 %v54
    %v87 = vunpack.c.l.b16 %v55
    %v88 = vpack.c.b16 %v73, %v72
    %v89 = vpack.c.b16 %v75, %v74
    %v90 = vpack.c.b16 %v77, %v76
    %v91 = vpack.c.b16 %v79, %v78
    %v92 = vpack.c.b16 %v81, %v80
    %v93 = vpack.c.b16 %v83, %v82
    %v94 = vpack.c.b16 %v85, %v84
    %v95 = vpack.c.b16 %v87, %v86
    %104 = vmatprep.subr.bf16.mxu0 0
    %105 = vmatpush1.bf16.msra.mxu0 %v95
    %106 = vmatprep.subr.bf16.mxu0 0
    %107 = vmatpush1.bf16.msra.mxu0 %v94
    %108 = vmatprep.subr.bf16.mxu0 0
    %109 = vmatpush1.bf16.msra.mxu0 %v93
    %110 = vmatprep.subr.bf16.mxu0 0
    %111 = vmatpush1.bf16.msra.mxu0 %v92
    %112 = vmatprep.subr.bf16.mxu0 0
    %113 = vmatpush1.bf16.msra.mxu0 %v91
    %114 = vmatprep.subr.bf16.mxu0 0
    %115 = vmatpush1.bf16.msra.mxu0 %v90
    %116 = vmatprep.subr.bf16.mxu0 0
    %117 = vmatpush1.bf16.msra.mxu0 %v89
    %118 = vmatprep.subr.bf16.mxu0 0
    %119 = vmatpush1.bf16.msra.mxu0 %v88
    %120 = vmatprep.subr.bf16.mxu0 0
    %121 = vmatpush2.bf16.msra.mxu0 0
    %122 = vmatprep.subr.bf16.mxu0 0
    %123 = vmatpush2.bf16.msra.mxu0 0
    %124 = vmatprep.subr.bf16.mxu0 0
    %125 = vmatpush2.bf16.msra.mxu0 0
    %126 = vmatprep.subr.bf16.mxu0 0
    %127 = vmatpush2.bf16.msra.mxu0 0
    %128 = vmatprep.subr.bf16.mxu0 0
    %129 = vmatpush2.bf16.msra.mxu0 0
    %130 = vmatprep.subr.bf16.mxu0 0
    %131 = vmatpush2.bf16.msra.mxu0 0
    %132 = vmatprep.subr.bf16.mxu0 0
    %133 = vmatpush2.bf16.msra.mxu0 0
    %134 = vmatprep.subr.bf16.mxu0 0
    %135 = vmatpush2.bf16.msra.mxu0 0
    %136 = vmatprep.mubr.bf16.mxu0 0
    %137 = vmatmul.mubr.bf16.gmra.mxu0 %v32
    %v138 = vpop.f32.mrf.mxu0
    %v139 = vadd.f32 0.0, %v138
    %v140 = vpop.f32.mrf.mxu0
    %v141 = vpop.f32.mrf.mxu0
    %v142 = vadd.f32 0.0, %v141
    %v143 = vpop.f32.mrf.mxu0
    %144 = vmatprep.mubr.bf16.mxu0 0
    %145 = vmatmul.mubr.bf16.gmra.mxu0 %v33
    %v146 = vpop.f32.mrf.mxu0
    %v147 = vadd.f32 0.0, %v146
    %v148 = vpop.f32.mrf.mxu0
    %v149 = vpop.f32.mrf.mxu0
    %v150 = vadd.f32 0.0, %v149
    %v151 = vpop.f32.mrf.mxu0
    %152 = vmatprep.mubr.bf16.mxu0 0
    %153 = vmatmul.mubr.bf16.gmra.mxu0 %v34
    %v154 = vpop.f32.mrf.mxu0
    %v155 = vadd.f32 0.0, %v154
    %v156 = vpop.f32.mrf.mxu0
    %v157 = vpop.f32.mrf.mxu0
    %v158 = vadd.f32 0.0, %v157
    %v159 = vpop.f32.mrf.mxu0
    %160 = vmatprep.mubr.bf16.mxu0 0
    %161 = vmatmul.mubr.bf16.gmra.mxu0 %v35
    %v162 = vpop.f32.mrf.mxu0
    %v163 = vadd.f32 0.0, %v162
    %v164 = vpop.f32.mrf.mxu0
    %v165 = vpop.f32.mrf.mxu0
    %v166 = vadd.f32 0.0, %v165
    %v167 = vpop.f32.mrf.mxu0
    %168 = vmatprep.mubr.bf16.mxu0 0
    %169 = vmatmul.mubr.bf16.gmra.mxu0 %v36
    %v170 = vpop.f32.mrf.mxu0
    %v171 = vadd.f32 0.0, %v170
    %v172 = vpop.f32.mrf.mxu0
    %v173 = vpop.f32.mrf.mxu0
    %v174 = vadd.f32 0.0, %v173
    %v175 = vpop.f32.mrf.mxu0
    %176 = vmatprep.mubr.bf16.mxu0 0
    %177 = vmatmul.mubr.bf16.gmra.mxu0 %v37
    %v178 = vpop.f32.mrf.mxu0
    %v179 = vadd.f32 0.0, %v178
    %v180 = vpop.f32.mrf.mxu0
    %v181 = vpop.f32.mrf.mxu0
    %v182 = vadd.f32 0.0, %v181
    %v183 = vpop.f32.mrf.mxu0
    %184 = vmatprep.mubr.bf16.mxu0 0
    %185 = vmatmul.mubr.bf16.gmra.mxu0 %v38
    %v186 = vpop.f32.mrf.mxu0
    %v187 = vadd.f32 0.0, %v186
    %v188 = vpop.f32.mrf.mxu0
    %v189 = vpop.f32.mrf.mxu0
    %v190 = vadd.f32 0.0, %v189
    %v191 = vpop.f32.mrf.mxu0
    %192 = vmatprep.mubr.bf16.mxu0 0
    %193 = vmatmul.mubr.bf16.gmra.mxu0 %v39
    %v194 = vpop.f32.mrf.mxu0
    %v195 = vadd.f32 0.0, %v194
    %v196 = vpop.f32.mrf.mxu0
    %v197 = vpop.f32.mrf.mxu0
    %v198 = vadd.f32 0.0, %v197
    %v199 = vpop.f32.mrf.mxu0
    %200 = vdwg.mxu0
    %v201 = vld [vmem:[%s2] sm:$0xff]
    %v202 = vld [vmem:[%s2 + $0x8] sm:$0xff]
    %v203 = vld [vmem:[%s2 + $0x10] sm:$0xff]
    %v204 = vld [vmem:[%s2 + $0x18] sm:$0xff]
    %v205 = vld [vmem:[%s2 + $0x20] sm:$0xff]
    %v206 = vld [vmem:[%s2 + $0x28] sm:$0xff]
    %v207 = vld [vmem:[%s2 + $0x30] sm:$0xff]
    %v208 = vld [vmem:[%s2 + $0x38] sm:$0xff]
    %v209 = vld [vmem:[%s2 + $0x40] sm:$0xff]
    %v210 = vld [vmem:[%s2 + $0x48] sm:$0xff]
    %v211 = vld [vmem:[%s2 + $0x50] sm:$0xff]
    %v212 = vld [vmem:[%s2 + $0x58] sm:$0xff]
    %v213 = vld [vmem:[%s2 + $0x60] sm:$0xff]
    %v214 = vld [vmem:[%s2 + $0x68] sm:$0xff]
    %v215 = vld [vmem:[%s2 + $0x70] sm:$0xff]
    %v216 = vld [vmem:[%s2 + $0x78] sm:$0xff]
    %218 = vset.pattern.permute.xlu0 0
    %219 = vperm.xlu0 %218, %v201
    %v220 = vpop.permute.xlu0 %219
    %223 = vset.pattern.permute.xlu0 0
    %224 = vperm.xlu0 %223, %v202
    %v225 = vpop.permute.xlu0 %224
    %228 = vset.pattern.permute.xlu0 0
    %229 = vperm.xlu0 %228, %v203
    %v230 = vpop.permute.xlu0 %229
    %233 = vset.pattern.permute.xlu0 0
    %234 = vperm.xlu0 %233, %v204
    %v235 = vpop.permute.xlu0 %234
    %238 = vset.pattern.permute.xlu0 0
    %239 = vperm.xlu0 %238, %v205
    %v240 = vpop.permute.xlu0 %239
    %243 = vset.pattern.permute.xlu0 0
    %244 = vperm.xlu0 %243, %v206
    %v245 = vpop.permute.xlu0 %244
    %248 = vset.pattern.permute.xlu0 0
    %249 = vperm.xlu0 %248, %v207
    %v250 = vpop.permute.xlu0 %249
    %253 = vset.pattern.permute.xlu0 0
    %254 = vperm.xlu0 %253, %v208
    %v255 = vpop.permute.xlu0 %254
    %258 = vset.pattern.permute.xlu0 0
    %259 = vperm.xlu0 %258, %v209
    %v260 = vpop.permute.xlu0 %259
    %263 = vset.pattern.permute.xlu0 0
    %264 = vperm.xlu0 %263, %v210
    %v265 = vpop.permute.xlu0 %264
    %268 = vset.pattern.permute.xlu0 0
    %269 = vperm.xlu0 %268, %v211
    %v270 = vpop.permute.xlu0 %269
    %273 = vset.pattern.permute.xlu0 0
    %274 = vperm.xlu0 %273, %v212
    %v275 = vpop.permute.xlu0 %274
    %278 = vset.pattern.permute.xlu0 0
    %279 = vperm.xlu0 %278, %v213
    %v280 = vpop.permute.xlu0 %279
    %283 = vset.pattern.permute.xlu0 0
    %284 = vperm.xlu0 %283, %v214
    %v285 = vpop.permute.xlu0 %284
    %288 = vset.pattern.permute.xlu0 0
    %289 = vperm.xlu0 %288, %v215
    %v290 = vpop.permute.xlu0 %289
    %293 = vset.pattern.permute.xlu0 0
    %294 = vperm.xlu0 %293, %v216
    %v295 = vpop.permute.xlu0 %294
    %v297 = vmul.f32 %v139, %v220
    %v298 = vmul.f32 %v142, %v225
    %v299 = vmul.f32 %v147, %v230
    %v300 = vmul.f32 %v150, %v235
    %v301 = vmul.f32 %v155, %v240
    %v302 = vmul.f32 %v158, %v245
    %v303 = vmul.f32 %v163, %v250
    %v304 = vmul.f32 %v166, %v255
    %v305 = vmul.f32 %v171, %v260
    %v306 = vmul.f32 %v174, %v265
    %v307 = vmul.f32 %v179, %v270
    %v308 = vmul.f32 %v182, %v275
    %v309 = vmul.f32 %v187, %v280
    %v310 = vmul.f32 %v190, %v285
    %v311 = vmul.f32 %v195, %v290
    %v312 = vmul.f32 %v198, %v295
    %v313 = vmax.f32 %v297, 0.0
    %v314 = vmax.f32 %v298, 0.0
    %v315 = vmax.f32 %v299, 0.0
    %v316 = vmax.f32 %v300, 0.0
    %v317 = vmax.f32 %v301, 0.0
    %v318 = vmax.f32 %v302, 0.0
    %v319 = vmax.f32 %v303, 0.0
    %v320 = vmax.f32 %v304, 0.0
    %v321 = vmax.f32 %v305, 0.0
    %v322 = vmax.f32 %v306, 0.0
    %v323 = vmax.f32 %v307, 0.0
    %v324 = vmax.f32 %v308, 0.0
    %v325 = vmax.f32 %v309, 0.0
    %v326 = vmax.f32 %v310, 0.0
    %v327 = vmax.f32 %v311, 0.0
    %v328 = vmax.f32 %v312, 0.0
    %v329 = vpack.c.bf16 %v314, %v313
    %v330 = vpack.c.bf16 %v316, %v315
    %v331 = vpack.c.bf16 %v318, %v317
    %v332 = vpack.c.bf16 %v320, %v319
    %v333 = vpack.c.bf16 %v322, %v321
    %v334 = vpack.c.bf16 %v324, %v323
    %v335 = vpack.c.bf16 %v326, %v325
    %v336 = vpack.c.bf16 %v328, %v327
    %s337 = scalar_lea.vmem %s1, 64
    %v338 = vld [vmem:[%s337] sm:$0xf]
    %v339 = vld [vmem:[%s337 + $0x4] sm:$0xf]
    %v340 = vld [vmem:[%s337 + $0x8] sm:$0xf]
    %v341 = vld [vmem:[%s337 + $0xc] sm:$0xf]
    %v342 = vld [vmem:[%s337 + $0x10] sm:$0xf]
    %v343 = vld [vmem:[%s337 + $0x14] sm:$0xf]
    %v344 = vld [vmem:[%s337 + $0x18] sm:$0xf]
    %v345 = vld [vmem:[%s337 + $0x1c] sm:$0xf]
    %v346 = vld [vmem:[%s337 + $0x20] sm:$0xf]
    %v347 = vld [vmem:[%s337 + $0x24] sm:$0xf]
    %v348 = vld [vmem:[%s337 + $0x28] sm:$0xf]
    %v349 = vld [vmem:[%s337 + $0x2c] sm:$0xf]
    %v350 = vld [vmem:[%s337 + $0x30] sm:$0xf]
    %v351 = vld [vmem:[%s337 + $0x34] sm:$0xf]
    %v352 = vld [vmem:[%s337 + $0x38] sm:$0xf]
    %v353 = vld [vmem:[%s337 + $0x3c] sm:$0xf]
    %v370 = vunpack.c.l.b16 %v338
    %v371 = vunpack.c.l.b16 %v339
    %v372 = vunpack.c.l.b16 %v340
    %v373 = vunpack.c.l.b16 %v341
    %v374 = vunpack.c.l.b16 %v342
    %v375 = vunpack.c.l.b16 %v343
    %v376 = vunpack.c.l.b16 %v344
    %v377 = vunpack.c.l.b16 %v345
    %v378 = vunpack.c.l.b16 %v346
    %v379 = vunpack.c.l.b16 %v347
    %v380 = vunpack.c.l.b16 %v348
    %v381 = vunpack.c.l.b16 %v349
    %v382 = vunpack.c.l.b16 %v350
    %v383 = vunpack.c.l.b16 %v351
    %v384 = vunpack.c.l.b16 %v352
    %v385 = vunpack.c.l.b16 %v353
    %v386 = vpack.c.b16 %v371, %v370
    %v387 = vpack.c.b16 %v373, %v372
    %v388 = vpack.c.b16 %v375, %v374
    %v389 = vpack.c.b16 %v377, %v376
    %v390 = vpack.c.b16 %v379, %v378
    %v391 = vpack.c.b16 %v381, %v380
    %v392 = vpack.c.b16 %v383, %v382
    %v393 = vpack.c.b16 %v385, %v384
    %402 = vmatprep.subr.bf16.mxu0 0
    %403 = vmatpush1.bf16.msra.mxu0 %v393
    %404 = vmatprep.subr.bf16.mxu0 0
    %405 = vmatpush1.bf16.msra.mxu0 %v392
    %406 = vmatprep.subr.bf16.mxu0 0
    %407 = vmatpush1.bf16.msra.mxu0 %v391
    %408 = vmatprep.subr.bf16.mxu0 0
    %409 = vmatpush1.bf16.msra.mxu0 %v390
    %410 = vmatprep.subr.bf16.mxu0 0
    %411 = vmatpush1.bf16.msra.mxu0 %v389
    %412 = vmatprep.subr.bf16.mxu0 0
    %413 = vmatpush1.bf16.msra.mxu0 %v388
    %414 = vmatprep.subr.bf16.mxu0 0
    %415 = vmatpush1.bf16.msra.mxu0 %v387
    %416 = vmatprep.subr.bf16.mxu0 0
    %417 = vmatpush1.bf16.msra.mxu0 %v386
    %418 = vmatprep.subr.bf16.mxu0 0
    %419 = vmatpush2.bf16.msra.mxu0 0
    %420 = vmatprep.subr.bf16.mxu0 0
    %421 = vmatpush2.bf16.msra.mxu0 0
    %422 = vmatprep.subr.bf16.mxu0 0
    %423 = vmatpush2.bf16.msra.mxu0 0
    %424 = vmatprep.subr.bf16.mxu0 0
    %425 = vmatpush2.bf16.msra.mxu0 0
    %426 = vmatprep.subr.bf16.mxu0 0
    %427 = vmatpush2.bf16.msra.mxu0 0
    %428 = vmatprep.subr.bf16.mxu0 0
    %429 = vmatpush2.bf16.msra.mxu0 0
    %430 = vmatprep.subr.bf16.mxu0 0
    %431 = vmatpush2.bf16.msra.mxu0 0
    %432 = vmatprep.subr.bf16.mxu0 0
    %433 = vmatpush2.bf16.msra.mxu0 0
    %434 = vmatprep.mubr.bf16.mxu0 0
    %435 = vmatmul.mubr.bf16.gmra.mxu0 %v329
    %v436 = vpop.f32.mrf.mxu0
    %v437 = vadd.f32 0.0, %v436
    %v438 = vpop.f32.mrf.mxu0
    %v439 = vpop.f32.mrf.mxu0
    %v440 = vadd.f32 0.0, %v439
    %v441 = vpop.f32.mrf.mxu0
    %442 = vmatprep.mubr.bf16.mxu0 0
    %443 = vmatmul.mubr.bf16.gmra.mxu0 %v330
    %v444 = vpop.f32.mrf.mxu0
    %v445 = vadd.f32 0.0, %v444
    %v446 = vpop.f32.mrf.mxu0
    %v447 = vpop.f32.mrf.mxu0
    %v448 = vadd.f32 0.0, %v447
    %v449 = vpop.f32.mrf.mxu0
    %450 = vmatprep.mubr.bf16.mxu0 0
    %451 = vmatmul.mubr.bf16.gmra.mxu0 %v331
    %v452 = vpop.f32.mrf.mxu0
    %v453 = vadd.f32 0.0, %v452
    %v454 = vpop.f32.mrf.mxu0
    %v455 = vpop.f32.mrf.mxu0
    %v456 = vadd.f32 0.0, %v455
    %v457 = vpop.f32.mrf.mxu0
    %458 = vmatprep.mubr.bf16.mxu0 0
    %459 = vmatmul.mubr.bf16.gmra.mxu0 %v332
    %v460 = vpop.f32.mrf.mxu0
    %v461 = vadd.f32 0.0, %v460
    %v462 = vpop.f32.mrf.mxu0
    %v463 = vpop.f32.mrf.mxu0
    %v464 = vadd.f32 0.0, %v463
    %v465 = vpop.f32.mrf.mxu0
    %466 = vmatprep.mubr.bf16.mxu0 0
    %467 = vmatmul.mubr.bf16.gmra.mxu0 %v333
    %v468 = vpop.f32.mrf.mxu0
    %v469 = vadd.f32 0.0, %v468
    %v470 = vpop.f32.mrf.mxu0
    %v471 = vpop.f32.mrf.mxu0
    %v472 = vadd.f32 0.0, %v471
    %v473 = vpop.f32.mrf.mxu0
    %474 = vmatprep.mubr.bf16.mxu0 0
    %475 = vmatmul.mubr.bf16.gmra.mxu0 %v334
    %v476 = vpop.f32.mrf.mxu0
    %v477 = vadd.f32 0.0, %v476
    %v478 = vpop.f32.mrf.mxu0
    %v479 = vpop.f32.mrf.mxu0
    %v480 = vadd.f32 0.0, %v479
    %v481 = vpop.f32.mrf.mxu0
    %482 = vmatprep.mubr.bf16.mxu0 0
    %483 = vmatmul.mubr.bf16.gmra.mxu0 %v335
    %v484 = vpop.f32.mrf.mxu0
    %v485 = vadd.f32 0.0, %v484
    %v486 = vpop.f32.mrf.mxu0
    %v487 = vpop.f32.mrf.mxu0
    %v488 = vadd.f32 0.0, %v487
    %v489 = vpop.f32.mrf.mxu0
    %490 = vmatprep.mubr.bf16.mxu0 0
    %491 = vmatmul.mubr.bf16.gmra.mxu0 %v336
    %v492 = vpop.f32.mrf.mxu0
    %v493 = vadd.f32 0.0, %v492
    %v494 = vpop.f32.mrf.mxu0
    %v495 = vpop.f32.mrf.mxu0
    %v496 = vadd.f32 0.0, %v495
    %v497 = vpop.f32.mrf.mxu0
    %498 = vdwg.mxu0
    %s499 = scalar_lea.vmem %s2, 128
    %v500 = vld [vmem:[%s499] sm:$0xff]
    %v501 = vld [vmem:[%s499 + $0x8] sm:$0xff]
    %v502 = vld [vmem:[%s499 + $0x10] sm:$0xff]
    %v503 = vld [vmem:[%s499 + $0x18] sm:$0xff]
    %v504 = vld [vmem:[%s499 + $0x20] sm:$0xff]
    %v505 = vld [vmem:[%s499 + $0x28] sm:$0xff]
    %v506 = vld [vmem:[%s499 + $0x30] sm:$0xff]
    %v507 = vld [vmem:[%s499 + $0x38] sm:$0xff]
    %v508 = vld [vmem:[%s499 + $0x40] sm:$0xff]
    %v509 = vld [vmem:[%s499 + $0x48] sm:$0xff]
    %v510 = vld [vmem:[%s499 + $0x50] sm:$0xff]
    %v511 = vld [vmem:[%s499 + $0x58] sm:$0xff]
    %v512 = vld [vmem:[%s499 + $0x60] sm:$0xff]
    %v513 = vld [vmem:[%s499 + $0x68] sm:$0xff]
    %v514 = vld [vmem:[%s499 + $0x70] sm:$0xff]
    %v515 = vld [vmem:[%s499 + $0x78] sm:$0xff]
    %517 = vset.pattern.permute.xlu0 0
    %518 = vperm.xlu0 %517, %v500
    %v519 = vpop.permute.xlu0 %518
    %522 = vset.pattern.permute.xlu0 0
    %523 = vperm.xlu0 %522, %v501
    %v524 = vpop.permute.xlu0 %523
    %527 = vset.pattern.permute.xlu0 0
    %528 = vperm.xlu0 %527, %v502
    %v529 = vpop.permute.xlu0 %528
    %532 = vset.pattern.permute.xlu0 0
    %533 = vperm.xlu0 %532, %v503
    %v534 = vpop.permute.xlu0 %533
    %537 = vset.pattern.permute.xlu0 0
    %538 = vperm.xlu0 %537, %v504
    %v539 = vpop.permute.xlu0 %538
    %542 = vset.pattern.permute.xlu0 0
    %543 = vperm.xlu0 %542, %v505
    %v544 = vpop.permute.xlu0 %543
    %547 = vset.pattern.permute.xlu0 0
    %548 = vperm.xlu0 %547, %v506
    %v549 = vpop.permute.xlu0 %548
    %552 = vset.pattern.permute.xlu0 0
    %553 = vperm.xlu0 %552, %v507
    %v554 = vpop.permute.xlu0 %553
    %557 = vset.pattern.permute.xlu0 0
    %558 = vperm.xlu0 %557, %v508
    %v559 = vpop.permute.xlu0 %558
    %562 = vset.pattern.permute.xlu0 0
    %563 = vperm.xlu0 %562, %v509
    %v564 = vpop.permute.xlu0 %563
    %567 = vset.pattern.permute.xlu0 0
    %568 = vperm.xlu0 %567, %v510
    %v569 = vpop.permute.xlu0 %568
    %572 = vset.pattern.permute.xlu0 0
    %573 = vperm.xlu0 %572, %v511
    %v574 = vpop.permute.xlu0 %573
    %577 = vset.pattern.permute.xlu0 0
    %578 = vperm.xlu0 %577, %v512
    %v579 = vpop.permute.xlu0 %578
    %582 = vset.pattern.permute.xlu0 0
    %583 = vperm.xlu0 %582, %v513
    %v584 = vpop.permute.xlu0 %583
    %587 = vset.pattern.permute.xlu0 0
    %588 = vperm.xlu0 %587, %v514
    %v589 = vpop.permute.xlu0 %588
    %592 = vset.pattern.permute.xlu0 0
    %593 = vperm.xlu0 %592, %v515
    %v594 = vpop.permute.xlu0 %593
    %v596 = vmul.f32 %v437, %v519
    %v597 = vmul.f32 %v440, %v524
    %v598 = vmul.f32 %v445, %v529
    %v599 = vmul.f32 %v448, %v534
    %v600 = vmul.f32 %v453, %v539
    %v601 = vmul.f32 %v456, %v544
    %v602 = vmul.f32 %v461, %v549
    %v603 = vmul.f32 %v464, %v554
    %v604 = vmul.f32 %v469, %v559
    %v605 = vmul.f32 %v472, %v564
    %v606 = vmul.f32 %v477, %v569
    %v607 = vmul.f32 %v480, %v574
    %v608 = vmul.f32 %v485, %v579
    %v609 = vmul.f32 %v488, %v584
    %v610 = vmul.f32 %v493, %v589
    %v611 = vmul.f32 %v496, %v594
    %v612 = vmax.f32 %v596, 0.0
    %v613 = vmax.f32 %v597, 0.0
    %v614 = vmax.f32 %v598, 0.0
    %v615 = vmax.f32 %v599, 0.0
    %v616 = vmax.f32 %v600, 0.0
    %v617 = vmax.f32 %v601, 0.0
    %v618 = vmax.f32 %v602, 0.0
    %v619 = vmax.f32 %v603, 0.0
    %v620 = vmax.f32 %v604, 0.0
    %v621 = vmax.f32 %v605, 0.0
    %v622 = vmax.f32 %v606, 0.0
    %v623 = vmax.f32 %v607, 0.0
    %v624 = vmax.f32 %v608, 0.0
    %v625 = vmax.f32 %v609, 0.0
    %v626 = vmax.f32 %v610, 0.0
    %v627 = vmax.f32 %v611, 0.0
    %v628 = vpack.c.bf16 %v613, %v612
    %v629 = vpack.c.bf16 %v615, %v614
    %v630 = vpack.c.bf16 %v617, %v616
    %v631 = vpack.c.bf16 %v619, %v618
    %v632 = vpack.c.bf16 %v621, %v620
    %v633 = vpack.c.bf16 %v623, %v622
    %v634 = vpack.c.bf16 %v625, %v624
    %v635 = vpack.c.bf16 %v627, %v626
    %s636 = scalar_lea.vmem %s1, 128
    %v637 = vld [vmem:[%s636] sm:$0xf]
    %v638 = vld [vmem:[%s636 + $0x4] sm:$0xf]
    %v639 = vld [vmem:[%s636 + $0x8] sm:$0xf]
    %v640 = vld [vmem:[%s636 + $0xc] sm:$0xf]
    %v641 = vld [vmem:[%s636 + $0x10] sm:$0xf]
    %v642 = vld [vmem:[%s636 + $0x14] sm:$0xf]
    %v643 = vld [vmem:[%s636 + $0x18] sm:$0xf]
    %v644 = vld [vmem:[%s636 + $0x1c] sm:$0xf]
    %v645 = vld [vmem:[%s636 + $0x20] sm:$0xf]
    %v646 = vld [vmem:[%s636 + $0x24] sm:$0xf]
    %v647 = vld [vmem:[%s636 + $0x28] sm:$0xf]
    %v648 = vld [vmem:[%s636 + $0x2c] sm:$0xf]
    %v649 = vld [vmem:[%s636 + $0x30] sm:$0xf]
    %v650 = vld [vmem:[%s636 + $0x34] sm:$0xf]
    %v651 = vld [vmem:[%s636 + $0x38] sm:$0xf]
    %v652 = vld [vmem:[%s636 + $0x3c] sm:$0xf]
    %v669 = vunpack.c.l.b16 %v637
    %v670 = vunpack.c.l.b16 %v638
    %v671 = vunpack.c.l.b16 %v639
    %v672 = vunpack.c.l.b16 %v640
    %v673 = vunpack.c.l.b16 %v641
    %v674 = vunpack.c.l.b16 %v642
    %v675 = vunpack.c.l.b16 %v643
    %v676 = vunpack.c.l.b16 %v644
    %v677 = vunpack.c.l.b16 %v645
    %v678 = vunpack.c.l.b16 %v646
    %v679 = vunpack.c.l.b16 %v647
    %v680 = vunpack.c.l.b16 %v648
    %v681 = vunpack.c.l.b16 %v649
    %v682 = vunpack.c.l.b16 %v650
    %v683 = vunpack.c.l.b16 %v651
    %v684 = vunpack.c.l.b16 %v652
    %v685 = vpack.c.b16 %v670, %v669
    %v686 = vpack.c.b16 %v672, %v671
    %v687 = vpack.c.b16 %v674, %v673
    %v688 = vpack.c.b16 %v676, %v675
    %v689 = vpack.c.b16 %v678, %v677
    %v690 = vpack.c.b16 %v680, %v679
    %v691 = vpack.c.b16 %v682, %v681
    %v692 = vpack.c.b16 %v684, %v683
    %701 = vmatprep.subr.bf16.mxu0 0
    %702 = vmatpush1.bf16.msra.mxu0 %v692
    %703 = vmatprep.subr.bf16.mxu0 0
    %704 = vmatpush1.bf16.msra.mxu0 %v691
    %705 = vmatprep.subr.bf16.mxu0 0
    %706 = vmatpush1.bf16.msra.mxu0 %v690
    %707 = vmatprep.subr.bf16.mxu0 0
    %708 = vmatpush1.bf16.msra.mxu0 %v689
    %709 = vmatprep.subr.bf16.mxu0 0
    %710 = vmatpush1.bf16.msra.mxu0 %v688
    %711 = vmatprep.subr.bf16.mxu0 0
    %712 = vmatpush1.bf16.msra.mxu0 %v687
    %713 = vmatprep.subr.bf16.mxu0 0
    %714 = vmatpush1.bf16.msra.mxu0 %v686
    %715 = vmatprep.subr.bf16.mxu0 0
    %716 = vmatpush1.bf16.msra.mxu0 %v685
    %717 = vmatprep.subr.bf16.mxu0 0
    %718 = vmatpush2.bf16.msra.mxu0 0
    %719 = vmatprep.subr.bf16.mxu0 0
    %720 = vmatpush2.bf16.msra.mxu0 0
    %721 = vmatprep.subr.bf16.mxu0 0
    %722 = vmatpush2.bf16.msra.mxu0 0
    %723 = vmatprep.subr.bf16.mxu0 0
    %724 = vmatpush2.bf16.msra.mxu0 0
    %725 = vmatprep.subr.bf16.mxu0 0
    %726 = vmatpush2.bf16.msra.mxu0 0
    %727 = vmatprep.subr.bf16.mxu0 0
    %728 = vmatpush2.bf16.msra.mxu0 0
    %729 = vmatprep.subr.bf16.mxu0 0
    %730 = vmatpush2.bf16.msra.mxu0 0
    %731 = vmatprep.subr.bf16.mxu0 0
    %732 = vmatpush2.bf16.msra.mxu0 0
    %733 = vmatprep.mubr.bf16.mxu0 0
    %734 = vmatmul.mubr.bf16.gmra.mxu0 %v628
    %v735 = vpop.f32.mrf.mxu0
    %v736 = vadd.f32 0.0, %v735
    %v737 = vpop.f32.mrf.mxu0
    %v738 = vpop.f32.mrf.mxu0
    %v739 = vadd.f32 0.0, %v738
    %v740 = vpop.f32.mrf.mxu0
    %741 = vmatprep.mubr.bf16.mxu0 0
    %742 = vmatmul.mubr.bf16.gmra.mxu0 %v629
    %v743 = vpop.f32.mrf.mxu0
    %v744 = vadd.f32 0.0, %v743
    %v745 = vpop.f32.mrf.mxu0
    %v746 = vpop.f32.mrf.mxu0
    %v747 = vadd.f32 0.0, %v746
    %v748 = vpop.f32.mrf.mxu0
    %749 = vmatprep.mubr.bf16.mxu0 0
    %750 = vmatmul.mubr.bf16.gmra.mxu0 %v630
    %v751 = vpop.f32.mrf.mxu0
    %v752 = vadd.f32 0.0, %v751
    %v753 = vpop.f32.mrf.mxu0
    %v754 = vpop.f32.mrf.mxu0
    %v755 = vadd.f32 0.0, %v754
    %v756 = vpop.f32.mrf.mxu0
    %757 = vmatprep.mubr.bf16.mxu0 0
    %758 = vmatmul.mubr.bf16.gmra.mxu0 %v631
    %v759 = vpop.f32.mrf.mxu0
    %v760 = vadd.f32 0.0, %v759
    %v761 = vpop.f32.mrf.mxu0
    %v762 = vpop.f32.mrf.mxu0
    %v763 = vadd.f32 0.0, %v762
    %v764 = vpop.f32.mrf.mxu0
    %765 = vmatprep.mubr.bf16.mxu0 0
    %766 = vmatmul.mubr.bf16.gmra.mxu0 %v632
    %v767 = vpop.f32.mrf.mxu0
    %v768 = vadd.f32 0.0, %v767
    %v769 = vpop.f32.mrf.mxu0
    %v770 = vpop.f32.mrf.mxu0
    %v771 = vadd.f32 0.0, %v770
    %v772 = vpop.f32.mrf.mxu0
    %773 = vmatprep.mubr.bf16.mxu0 0
    %774 = vmatmul.mubr.bf16.gmra.mxu0 %v633
    %v775 = vpop.f32.mrf.mxu0
    %v776 = vadd.f32 0.0, %v775
    %v777 = vpop.f32.mrf.mxu0
    %v778 = vpop.f32.mrf.mxu0
    %v779 = vadd.f32 0.0, %v778
    %v780 = vpop.f32.mrf.mxu0
    %781 = vmatprep.mubr.bf16.mxu0 0
    %782 = vmatmul.mubr.bf16.gmra.mxu0 %v634
    %v783 = vpop.f32.mrf.mxu0
    %v784 = vadd.f32 0.0, %v783
    %v785 = vpop.f32.mrf.mxu0
    %v786 = vpop.f32.mrf.mxu0
    %v787 = vadd.f32 0.0, %v786
    %v788 = vpop.f32.mrf.mxu0
    %789 = vmatprep.mubr.bf16.mxu0 0
    %790 = vmatmul.mubr.bf16.gmra.mxu0 %v635
    %v791 = vpop.f32.mrf.mxu0
    %v792 = vadd.f32 0.0, %v791
    %v793 = vpop.f32.mrf.mxu0
    %v794 = vpop.f32.mrf.mxu0
    %v795 = vadd.f32 0.0, %v794
    %v796 = vpop.f32.mrf.mxu0
    %797 = vdwg.mxu0
    %s798 = scalar_lea.vmem %s2, 256
    %v799 = vld [vmem:[%s798] sm:$0xff]
    %v800 = vld [vmem:[%s798 + $0x8] sm:$0xff]
    %v801 = vld [vmem:[%s798 + $0x10] sm:$0xff]
    %v802 = vld [vmem:[%s798 + $0x18] sm:$0xff]
    %v803 = vld [vmem:[%s798 + $0x20] sm:$0xff]
    %v804 = vld [vmem:[%s798 + $0x28] sm:$0xff]
    %v805 = vld [vmem:[%s798 + $0x30] sm:$0xff]
    %v806 = vld [vmem:[%s798 + $0x38] sm:$0xff]
    %v807 = vld [vmem:[%s798 + $0x40] sm:$0xff]
    %v808 = vld [vmem:[%s798 + $0x48] sm:$0xff]
    %v809 = vld [vmem:[%s798 + $0x50] sm:$0xff]
    %v810 = vld [vmem:[%s798 + $0x58] sm:$0xff]
    %v811 = vld [vmem:[%s798 + $0x60] sm:$0xff]
    %v812 = vld [vmem:[%s798 + $0x68] sm:$0xff]
    %v813 = vld [vmem:[%s798 + $0x70] sm:$0xff]
    %v814 = vld [vmem:[%s798 + $0x78] sm:$0xff]
    %816 = vset.pattern.permute.xlu0 0
    %817 = vperm.xlu0 %816, %v799
    %v818 = vpop.permute.xlu0 %817
    %821 = vset.pattern.permute.xlu0 0
    %822 = vperm.xlu0 %821, %v800
    %v823 = vpop.permute.xlu0 %822
    %826 = vset.pattern.permute.xlu0 0
    %827 = vperm.xlu0 %826, %v801
    %v828 = vpop.permute.xlu0 %827
    %831 = vset.pattern.permute.xlu0 0
    %832 = vperm.xlu0 %831, %v802
    %v833 = vpop.permute.xlu0 %832
    %836 = vset.pattern.permute.xlu0 0
    %837 = vperm.xlu0 %836, %v803
    %v838 = vpop.permute.xlu0 %837
    %841 = vset.pattern.permute.xlu0 0
    %842 = vperm.xlu0 %841, %v804
    %v843 = vpop.permute.xlu0 %842
    %846 = vset.pattern.permute.xlu0 0
    %847 = vperm.xlu0 %846, %v805
    %v848 = vpop.permute.xlu0 %847
    %851 = vset.pattern.permute.xlu0 0
    %852 = vperm.xlu0 %851, %v806
    %v853 = vpop.permute.xlu0 %852
    %856 = vset.pattern.permute.xlu0 0
    %857 = vperm.xlu0 %856, %v807
    %v858 = vpop.permute.xlu0 %857
    %861 = vset.pattern.permute.xlu0 0
    %862 = vperm.xlu0 %861, %v808
    %v863 = vpop.permute.xlu0 %862
    %866 = vset.pattern.permute.xlu0 0
    %867 = vperm.xlu0 %866, %v809
    %v868 = vpop.permute.xlu0 %867
    %871 = vset.pattern.permute.xlu0 0
    %872 = vperm.xlu0 %871, %v810
    %v873 = vpop.permute.xlu0 %872
    %876 = vset.pattern.permute.xlu0 0
    %877 = vperm.xlu0 %876, %v811
    %v878 = vpop.permute.xlu0 %877
    %881 = vset.pattern.permute.xlu0 0
    %882 = vperm.xlu0 %881, %v812
    %v883 = vpop.permute.xlu0 %882
    %886 = vset.pattern.permute.xlu0 0
    %887 = vperm.xlu0 %886, %v813
    %v888 = vpop.permute.xlu0 %887
    %891 = vset.pattern.permute.xlu0 0
    %892 = vperm.xlu0 %891, %v814
    %v893 = vpop.permute.xlu0 %892
    %v895 = vmul.f32 %v736, %v818
    %v896 = vmul.f32 %v739, %v823
    %v897 = vmul.f32 %v744, %v828
    %v898 = vmul.f32 %v747, %v833
    %v899 = vmul.f32 %v752, %v838
    %v900 = vmul.f32 %v755, %v843
    %v901 = vmul.f32 %v760, %v848
    %v902 = vmul.f32 %v763, %v853
    %v903 = vmul.f32 %v768, %v858
    %v904 = vmul.f32 %v771, %v863
    %v905 = vmul.f32 %v776, %v868
    %v906 = vmul.f32 %v779, %v873
    %v907 = vmul.f32 %v784, %v878
    %v908 = vmul.f32 %v787, %v883
    %v909 = vmul.f32 %v792, %v888
    %v910 = vmul.f32 %v795, %v893
    %v911 = vmax.f32 %v895, 0.0
    %v912 = vmax.f32 %v896, 0.0
    %v913 = vmax.f32 %v897, 0.0
    %v914 = vmax.f32 %v898, 0.0
    %v915 = vmax.f32 %v899, 0.0
    %v916 = vmax.f32 %v900, 0.0
    %v917 = vmax.f32 %v901, 0.0
    %v918 = vmax.f32 %v902, 0.0
    %v919 = vmax.f32 %v903, 0.0
    %v920 = vmax.f32 %v904, 0.0
    %v921 = vmax.f32 %v905, 0.0
    %v922 = vmax.f32 %v906, 0.0
    %v923 = vmax.f32 %v907, 0.0
    %v924 = vmax.f32 %v908, 0.0
    %v925 = vmax.f32 %v909, 0.0
    %v926 = vmax.f32 %v910, 0.0
    %927 = vst [vmem:[#allocation2] sm:$0xff] %v911
    %928 = vst [vmem:[#allocation2 + $0x8] sm:$0xff] %v912
    %929 = vst [vmem:[#allocation2 + $0x10] sm:$0xff] %v913
    %930 = vst [vmem:[#allocation2 + $0x18] sm:$0xff] %v914
    %931 = vst [vmem:[#allocation2 + $0x20] sm:$0xff] %v915
    %932 = vst [vmem:[#allocation2 + $0x28] sm:$0xff] %v916
    %933 = vst [vmem:[#allocation2 + $0x30] sm:$0xff] %v917
    %934 = vst [vmem:[#allocation2 + $0x38] sm:$0xff] %v918
    %935 = vst [vmem:[#allocation2 + $0x40] sm:$0xff] %v919
    %936 = vst [vmem:[#allocation2 + $0x48] sm:$0xff] %v920
    %937 = vst [vmem:[#allocation2 + $0x50] sm:$0xff] %v921
    %938 = vst [vmem:[#allocation2 + $0x58] sm:$0xff] %v922
    %939 = vst [vmem:[#allocation2 + $0x60] sm:$0xff] %v923
    %940 = vst [vmem:[#allocation2 + $0x68] sm:$0xff] %v924
    %941 = vst [vmem:[#allocation2 + $0x70] sm:$0xff] %v925
    %942 = vst [vmem:[#allocation2 + $0x78] sm:$0xff] %v926
    // Predicated region
    $region14: #{_fused_forward_resident.1} parent=1 // pred_check
      _
    $region15: #{_fused_forward_resident.1} parent=1 // pred_check_branch
      %944 = sbr.rel (0) target = $region17
    $region16: #{_fused_forward_resident.1} parent=1 // pred_region
      %s946 = ssub.s32 2048, 2048
      %947 = vsyncadd [#allocation3], %s946
      %s948 = sshll.u32 [#allocation2], 4
      %s949 = int_to_ptr.vmem [resolvable:$true] %s948
      %954 = dma.vmem_to_hbm [thread:$0]  %s949, 2048, %s3, [#allocation3], 128, 128, 8
    $region17: #{_fused_forward_resident.1} parent=1 // pred_fallthru
      _
    // Predicated region
    $region18: #{_fused_forward_resident.1} parent=1 // pred_check
      _
    $region19: #{_fused_forward_resident.1} parent=1 // pred_check_branch
      %956 = sbr.rel (0) target = $region21
    $region20: #{_fused_forward_resident.1} parent=1 // pred_region
      %957 = dma.done [#allocation3], 2048
    $region21: #{_fused_forward_resident.1} parent=1 // pred_fallthru
      _
    %958 = vsyncpa [#allocation3], 1

</llo_original>
